<compile_context>
chip_gen: v7x
topology: tpu7x:2x2x1
jax: 0.10.0
libtpu: 0.0.40
codegen_flags: <defaults>
</compile_context>

<pallas_src>
import jax
import jax.numpy as jnp
from jax.experimental import pallas as pl
from jax.experimental.pallas import tpu as pltpu  # noqa: F401  (not needed at this size)

LANE = 128


def _round_up(x, m):
    return ((x + m - 1) // m) * m


def _full_spec(shape):
    # Single-block spec: whole (small) array resident in VMEM. Full-array blocks satisfy
    # the (8,128) rule; node & feature dims are already padded to 128 where it matters.
    return pl.BlockSpec(shape, lambda: (0,) * len(shape))


# ---------------------------------------------------------------------------
# Fused kernel: num_layers x (GCN layer + ReLU), D^{-1/2} folded in as row scalings
# ---------------------------------------------------------------------------
def _make_fused_gcn_kernel(num_layers, use_agg_first):
    """relu(A_hat @ X @ W + b) per layer; A_hat = dinv * (A+I) * dinv^T never materialized."""

    def kernel(a_ref, dinv_ref, x_ref, *wb_out_refs):
        *wb_refs, o_ref = wb_out_refs
        a = a_ref[...]                                   # (Np, Np) bf16, A + I (zero-padded)
        dinv = dinv_ref[...]                             # (Np, 1)  f32, 0 on padded rows
        x = x_ref[...]                                   # (Np, Fp) f32

        for i in range(num_layers):
            w = wb_refs[2 * i][...]                      # (in_pad, Hp) bf16
            b = wb_refs[2 * i + 1][...]                  # (1, Hp)      f32
            if use_agg_first[i]:
                # (dinv_t * (A @ (dinv_s * X))) @ W      -- fewer flops when in_pad <= Hp
                xs = (dinv * x).astype(jnp.bfloat16)
                ax = jnp.dot(a, xs, preferred_element_type=jnp.float32)
                h = jnp.dot((dinv * ax).astype(jnp.bfloat16), w,
                            preferred_element_type=jnp.float32)
            else:
                # dinv_t * (A @ (dinv_s * (X @ W)))      -- fewer flops when in_pad > Hp
                xw = jnp.dot(x.astype(jnp.bfloat16), w,
                             preferred_element_type=jnp.float32)
                xs = (dinv * xw).astype(jnp.bfloat16)
                h = dinv * jnp.dot(a, xs, preferred_element_type=jnp.float32)
            x = jnp.maximum(h + b, 0.0)                  # ReLU + bias (VPU)

        o_ref[...] = x.astype(o_ref.dtype)               # lane-dense (Np, Hp) store

    return kernel


# ---------------------------------------------------------------------------
# One-time prep (outside the per-call path): adjacency, dinv, padded bf16 params
# ---------------------------------------------------------------------------
def build_adjacency(edge_index, num_nodes):
    """Dense A[t, s] = (# edges s->t) + self-loop (duplicates accumulate, like PyG scatter),
    zero-padded to Np = round_up(N, 128). Also returns dinv = rsqrt(rowsum) with 0 on
    padded rows. Built ONCE per graph."""
    n_pad = _round_up(num_nodes, LANE)
    src, tgt = edge_index[0], edge_index[1]
    a = jnp.zeros((num_nodes, num_nodes), jnp.float32)
    a = a.at[tgt, src].add(1.0)
    a = a + jnp.eye(num_nodes, dtype=jnp.float32)            # add_self_loops
    deg = jnp.sum(a, axis=1, keepdims=True)
    dinv = jnp.where(deg > 0.0, jax.lax.rsqrt(deg), 0.0)
    a_pad = jnp.zeros((n_pad, n_pad), jnp.float32).at[:num_nodes, :num_nodes].set(a)
    dinv_pad = jnp.zeros((n_pad, 1), jnp.float32).at[:num_nodes, :].set(dinv)
    # small-integer edge multiplicities are exact in bf16
    return a_pad.astype(jnp.bfloat16), dinv_pad


def init_gnn_stack_params(key, input_dim, hidden_dim, num_layers=2):
    """Glorot-uniform weights, zero bias (PyG GCNConv shapes: W (in_dim, hidden), b (hidden,))."""
    params = []
    for i in range(num_layers):
        in_dim = input_dim if i == 0 else hidden_dim
        key, wkey = jax.random.split(key)
        limit = (6.0 / (in_dim + hidden_dim)) ** 0.5
        w = jax.random.uniform(wkey, (in_dim, hidden_dim), jnp.float32,
                               minval=-limit, maxval=limit)
        b = jnp.zeros((hidden_dim,), jnp.float32)
        params.append((w, b))
    return params


def prepare_gnn_params(params, input_dim, hidden_dim):
    """Pad feature dims to 128 lanes, cast W to bf16, pick matmul order from PADDED dims.
    Done ONCE; keeps zero-padding / casting out of every forward call."""
    f_pad = _round_up(input_dim, LANE)
    h_pad = _round_up(hidden_dim, LANE)
    wb, use_agg_first = [], []
    for i, (w, b) in enumerate(params):
        in_dim = w.shape[0]
        in_pad = f_pad if i == 0 else h_pad
        w_p = (jnp.zeros((in_pad, h_pad), jnp.float32)
               .at[:in_dim, :hidden_dim].set(w).astype(jnp.bfloat16))
        b_p = jnp.zeros((1, h_pad), jnp.float32).at[0, :hidden_dim].set(b)
        wb += [w_p, b_p]
        # MXU executes padded shapes; ties prefer agg-first (both dots bf16 there too).
        use_agg_first.append(in_pad <= h_pad)
    return {"wb": tuple(wb), "use_agg_first": tuple(use_agg_first),
            "f_pad": f_pad, "h_pad": h_pad, "hidden_dim": hidden_dim,
            "num_layers": len(params)}


# ---------------------------------------------------------------------------
# Forward
# ---------------------------------------------------------------------------
def gnn_stack_forward(x, a_pad, dinv_pad, prepped):
    """x: (N, input_dim) f32; a_pad: (Np, Np) bf16; dinv_pad: (Np, 1) f32."""
    n, input_dim = x.shape
    n_pad = a_pad.shape[0]
    f_pad, h_pad = prepped["f_pad"], prepped["h_pad"]
    num_layers = prepped["num_layers"]

    # Zero-pad node rows and feature lanes (zeros keep the math exact; sliced off below).
    x_p = jnp.zeros((n_pad, f_pad), jnp.float32).at[:n, :input_dim].set(x)

    kernel = _make_fused_gcn_kernel(num_layers, prepped["use_agg_first"])

    in_specs = [_full_spec((n_pad, n_pad)),
                _full_spec((n_pad, 1)),
                _full_spec((n_pad, f_pad))]
    for i in range(num_layers):
        in_pad = f_pad if i == 0 else h_pad
        in_specs += [_full_spec((in_pad, h_pad)), _full_spec((1, h_pad))]

    out_p = pl.pallas_call(
        kernel,
        out_shape=jax.ShapeDtypeStruct((n_pad, h_pad), jnp.float32),
        in_specs=in_specs,
        out_specs=_full_spec((n_pad, h_pad)),
    )(a_pad, dinv_pad, x_p, *prepped["wb"])
    return out_p[:n, :prepped["hidden_dim"]]


# ---------------------------------------------------------------------------
# Pure-JAX f32 reference (materializes A_hat, f32 weights) for correctness checks
# ---------------------------------------------------------------------------
def _reference_forward(x, edge_index, params):
    n = x.shape[0]
    src, tgt = edge_index[0], edge_index[1]
    a = jnp.zeros((n, n), jnp.float32).at[tgt, src].add(1.0) + jnp.eye(n, dtype=jnp.float32)
    deg = jnp.sum(a, axis=1, keepdims=True)
    dinv = jnp.where(deg > 0.0, 1.0 / jnp.sqrt(deg), 0.0)
    a_hat = dinv * a * dinv.T
    h = x
    for w, b in params:
        h = jnp.maximum(a_hat @ (h @ w) + b[None, :], 0.0)
    return h


def _make_graph(key, n, n_extra=32):
    """Ring + random chords, both directions listed (no self-edges, matches PyG self-loop add)."""
    ring_src = jnp.arange(n, dtype=jnp.int32)
    ring_tgt = (ring_src + 1) % n
    extra_src = jax.random.randint(key, (n_extra,), 0, n, dtype=jnp.int32)
    extra_off = jax.random.randint(jax.random.fold_in(key, 1), (n_extra,), 1, n, dtype=jnp.int32)
    extra_tgt = (extra_src + extra_off) % n
    u = jnp.concatenate([ring_src, extra_src])
    v = jnp.concatenate([ring_tgt, extra_tgt])
    return jnp.stack([jnp.concatenate([u, v]), jnp.concatenate([v, u])], axis=0)


def _run_case(name, n, input_dim, hidden_dim, num_layers, seed):
    key = jax.random.PRNGKey(seed)
    key, xkey, ekey, pkey = jax.random.split(key, 4)
    x = jax.random.normal(xkey, (n, input_dim), jnp.float32)
    edge_index = _make_graph(ekey, n)

    # one-time prep (outside the forward path)
    a_pad, dinv_pad = build_adjacency(edge_index, n)
    params = init_gnn_stack_params(pkey, input_dim, hidden_dim, num_layers)
    prepped = prepare_gnn_params(params, input_dim, hidden_dim)

    out = gnn_stack_forward(x, a_pad, dinv_pad, prepped)
    out = jax.block_until_ready(out)

    assert out.shape == (n, hidden_dim) and out.dtype == jnp.float32, name
    assert bool(jnp.all(out >= 0.0)), name                      # ReLU after every layer

    ref = _reference_forward(x, edge_index, params)
    max_err = float(jnp.max(jnp.abs(out - ref)))
    scale = max(1.0, float(jnp.max(jnp.abs(ref))))
    assert max_err <= 1e-1 * scale, f"{name}: mismatch vs f32 reference: {max_err} (scale {scale})"
    return prepped["use_agg_first"]


if __name__ == "__main__":
    # Case 1: input_dim < hidden_dim  -> agg-first branch on both layers.
    flags1 = _run_case("agg_first", n=64, input_dim=16, hidden_dim=32, num_layers=2, seed=0)
    # Case 2: padded input_dim > padded hidden_dim -> X@W-first branch on layer 0.
    flags2 = _run_case("xw_first", n=64, input_dim=160, hidden_dim=32, num_layers=2, seed=0)
    assert all(flags1) and (not flags2[0]) and flags2[1]        # both code paths exercised

    print("KERNEL_OK")
</pallas_src>

<mosaic_0001>
module attributes {stable_mosaic.version = 11 : i64} {
  func.func @kernel(%arg0: memref<128x128xbf16, #tpu.memory_space<vmem>>, %arg1: memref<128x1xf32, #tpu.memory_space<vmem>>, %arg2: memref<128x128xf32, #tpu.memory_space<vmem>>, %arg3: memref<128x128xbf16, #tpu.memory_space<vmem>>, %arg4: memref<1x128xf32, #tpu.memory_space<vmem>>, %arg5: memref<128x128xbf16, #tpu.memory_space<vmem>>, %arg6: memref<1x128xf32, #tpu.memory_space<vmem>>, %arg7: memref<128x128xf32, #tpu.memory_space<vmem>>) attributes {dimension_semantics = [], scalar_prefetch = 0 : i64, scratch_operands = 0 : i64, tpu.core_type = #tpu.core_type<tc>} {
    %c0 = arith.constant 0 : index
    %c0_0 = arith.constant 0 : index
    %0 = vector.load %arg0[%c0, %c0_0] : memref<128x128xbf16, #tpu.memory_space<vmem>>, vector<128x128xbf16>
    %c0_1 = arith.constant 0 : index
    %c0_2 = arith.constant 0 : index
    %1 = vector.load %arg1[%c0_1, %c0_2] : memref<128x1xf32, #tpu.memory_space<vmem>>, vector<128x1xf32>
    %c0_3 = arith.constant 0 : index
    %c0_4 = arith.constant 0 : index
    %2 = vector.load %arg2[%c0_3, %c0_4] : memref<128x128xf32, #tpu.memory_space<vmem>>, vector<128x128xf32>
    %c0_5 = arith.constant 0 : index
    %c0_6 = arith.constant 0 : index
    %3 = vector.load %arg3[%c0_5, %c0_6] : memref<128x128xbf16, #tpu.memory_space<vmem>>, vector<128x128xbf16>
    %c0_7 = arith.constant 0 : index
    %c0_8 = arith.constant 0 : index
    %4 = vector.load %arg4[%c0_7, %c0_8] : memref<1x128xf32, #tpu.memory_space<vmem>>, vector<1x128xf32>
    %5 = vector.broadcast %1 : vector<128x1xf32> to vector<128x128xf32>
    %6 = arith.mulf %5, %2 : vector<128x128xf32>
    %7 = arith.truncf %6 : vector<128x128xf32> to vector<128x128xbf16>
    %cst = arith.constant dense<0.000000e+00> : vector<128x128xf32>
    %8 = tpu.matmul %0, %7, %cst {dimension_numbers = #tpu.dot_dimension_numbers<[1], [0], [0], [1], [0, 0, 1, 1], [], []>} : vector<128x128xbf16>, vector<128x128xbf16>, vector<128x128xf32> -> vector<128x128xf32>
    %9 = vector.broadcast %1 : vector<128x1xf32> to vector<128x128xf32>
    %10 = arith.mulf %9, %8 : vector<128x128xf32>
    %11 = arith.truncf %10 : vector<128x128xf32> to vector<128x128xbf16>
    %cst_9 = arith.constant dense<0.000000e+00> : vector<128x128xf32>
    %12 = tpu.matmul %11, %3, %cst_9 {dimension_numbers = #tpu.dot_dimension_numbers<[1], [0], [0], [1], [0, 0, 1, 1], [], []>} : vector<128x128xbf16>, vector<128x128xbf16>, vector<128x128xf32> -> vector<128x128xf32>
    %13 = vector.broadcast %4 : vector<1x128xf32> to vector<128x128xf32>
    %14 = arith.addf %12, %13 : vector<128x128xf32>
    %cst_10 = arith.constant 0.000000e+00 : f32
    %15 = vector.broadcast %cst_10 : f32 to vector<128x128xf32>
    %16 = arith.maximumf %14, %15 : vector<128x128xf32>
    %c0_11 = arith.constant 0 : index
    %c0_12 = arith.constant 0 : index
    %17 = vector.load %arg5[%c0_11, %c0_12] : memref<128x128xbf16, #tpu.memory_space<vmem>>, vector<128x128xbf16>
    %c0_13 = arith.constant 0 : index
    %c0_14 = arith.constant 0 : index
    %18 = vector.load %arg6[%c0_13, %c0_14] : memref<1x128xf32, #tpu.memory_space<vmem>>, vector<1x128xf32>
    %19 = vector.broadcast %1 : vector<128x1xf32> to vector<128x128xf32>
    %20 = arith.mulf %19, %16 : vector<128x128xf32>
    %21 = arith.truncf %20 : vector<128x128xf32> to vector<128x128xbf16>
    %cst_15 = arith.constant dense<0.000000e+00> : vector<128x128xf32>
    %22 = tpu.matmul %0, %21, %cst_15 {dimension_numbers = #tpu.dot_dimension_numbers<[1], [0], [0], [1], [0, 0, 1, 1], [], []>} : vector<128x128xbf16>, vector<128x128xbf16>, vector<128x128xf32> -> vector<128x128xf32>
    %23 = vector.broadcast %1 : vector<128x1xf32> to vector<128x128xf32>
    %24 = arith.mulf %23, %22 : vector<128x128xf32>
    %25 = arith.truncf %24 : vector<128x128xf32> to vector<128x128xbf16>
    %cst_16 = arith.constant dense<0.000000e+00> : vector<128x128xf32>
    %26 = tpu.matmul %25, %17, %cst_16 {dimension_numbers = #tpu.dot_dimension_numbers<[1], [0], [0], [1], [0, 0, 1, 1], [], []>} : vector<128x128xbf16>, vector<128x128xbf16>, vector<128x128xf32> -> vector<128x128xf32>
    %27 = vector.broadcast %18 : vector<1x128xf32> to vector<128x128xf32>
    %28 = arith.addf %26, %27 : vector<128x128xf32>
    %cst_17 = arith.constant 0.000000e+00 : f32
    %29 = vector.broadcast %cst_17 : f32 to vector<128x128xf32>
    %30 = arith.maximumf %28, %29 : vector<128x128xf32>
    %c0_18 = arith.constant 0 : index
    %c0_19 = arith.constant 0 : index
    %31 = vector.load %arg7[%c0_18, %c0_19] : memref<128x128xf32, #tpu.memory_space<vmem>>, vector<128x128xf32>
    tpu.vector_store %arg7[%c0_18, %c0_19], %30 {strides = array<i32>} : memref<128x128xf32, #tpu.memory_space<vmem>>, vector<128x128xf32>,
    return
  }
}

</mosaic_0001>

<llo_original>
// kernel: tpu_custom_call.1
$region0: #{tpu_custom_call.1}
  #allocation0 [shape = 'u32[]', space=smem, size = 0x4, offset = 0x4, fixed_abs, tag = 'smem constant byte address 0x4 - core index']
  #allocation1 [shape = 'u32[144,128]{1,0:T(1,128)}', space=vmem, size = 0x12000, scoped, tag = 'internal scratch']
  %s0 = inlined_call_operand.hbm [shape: bf16[128,128], index: 0, kind: input, shape index: {}]
  %s1 = inlined_call_operand.vmem [shape: f32[128,1], index: 1, kind: input, shape index: {}]
  %s2 = inlined_call_operand.vmem [shape: f32[128,128], index: 2, kind: input, shape index: {}]
  %s3 = inlined_call_operand.hbm [shape: bf16[128,128], index: 3, kind: input, shape index: {}]
  %s4 = inlined_call_operand.vmem [shape: f32[1,128], index: 4, kind: input, shape index: {}]
  %s5 = inlined_call_operand.hbm [shape: bf16[128,128], index: 5, kind: input, shape index: {}]
  %s6 = inlined_call_operand.vmem [shape: f32[1,128], index: 6, kind: input, shape index: {}]
  %s7 = inlined_call_operand.hbm [shape: f32[128,128], index: 7, kind: output, shape index: {}]
  %s8 = sld [smem:[#allocation0]]
  $region50: #{tpu_custom_call.1} parent=0
    _
  %s10 = ssub.s32 1, %s8
  %s11 = scalar_select 0, %s10, %s8
  $region1: #{tpu_custom_call.1} parent=0
    #allocation2 [shape = 'u8[32768]{0}', space=vmem, size = 0x8000, scoped, tag = 'input window, operand 0, single buffered']
    #allocation3 [shape = 's32[1]{0}', space=sflag, size = 0x4, scoped, tag = 'scoped memory for tpu_custom_call.1']
    #allocation4 [shape = 's32[1]{0}', space=sflag, size = 0x4, scoped, tag = 'scoped memory for tpu_custom_call.1']
    #allocation5 [shape = 'u8[32768]{0}', space=vmem, size = 0x8000, scoped, tag = 'input window, operand 3, single buffered']
    #allocation6 [shape = 's32[1]{0}', space=sflag, size = 0x4, scoped, tag = 'scoped memory for tpu_custom_call.1']
    #allocation7 [shape = 'u8[32768]{0}', space=vmem, size = 0x8000, scoped, tag = 'input window, operand 5, single buffered']
    #allocation8 [shape = 'u8[65536]{0}', space=vmem, size = 0x10000, scoped, tag = 'output window, operand 0, single buffered']
    %12 = vsyncpa [#allocation3], 0
    %13 = vsyncpa [#allocation6], 0
    %14 = vsyncpa [#allocation4], 0
    // Predicated region
    $region2: #{tpu_custom_call.1} parent=1 // pred_check
      _
    $region3: #{tpu_custom_call.1} parent=1 // pred_check_branch
      %16 = sbr.rel (0) target = $region5
    $region4: #{tpu_custom_call.1} parent=1 // pred_region
      %s18 = ssub.s32 1024, 1024
      %19 = vsyncadd [#allocation3], %s18
      %s20 = sshll.u32 [#allocation2], 4
      %s21 = int_to_ptr.vmem [resolvable:$true] %s20
      %26 = dma.hbm_to_vmem [thread:$0]  %s0, 1024, %s21, [#allocation3], 64, 64, 4
    $region5: #{tpu_custom_call.1} parent=1 // pred_fallthru
      _
    // Predicated region
    $region6: #{tpu_custom_call.1} parent=1 // pred_check
      _
    $region7: #{tpu_custom_call.1} parent=1 // pred_check_branch
      %28 = sbr.rel (0) target = $region9
    $region8: #{tpu_custom_call.1} parent=1 // pred_region
      _
    $region9: #{tpu_custom_call.1} parent=1 // pred_fallthru
      _
    // Predicated region
    $region10: #{tpu_custom_call.1} parent=1 // pred_check
      _
    $region11: #{tpu_custom_call.1} parent=1 // pred_check_branch
      %30 = sbr.rel (0) target = $region13
    $region12: #{tpu_custom_call.1} parent=1 // pred_region
      _
    $region13: #{tpu_custom_call.1} parent=1 // pred_fallthru
      _
    // Predicated region
    $region14: #{tpu_custom_call.1} parent=1 // pred_check
      _
    $region15: #{tpu_custom_call.1} parent=1 // pred_check_branch
      %32 = sbr.rel (0) target = $region17
    $region16: #{tpu_custom_call.1} parent=1 // pred_region
      %s34 = ssub.s32 1024, 1024
      %35 = vsyncadd [#allocation6], %s34
      %s36 = sshll.u32 [#allocation5], 4
      %s37 = int_to_ptr.vmem [resolvable:$true] %s36
      %42 = dma.hbm_to_vmem [thread:$0]  %s3, 1024, %s37, [#allocation6], 64, 64, 4
    $region17: #{tpu_custom_call.1} parent=1 // pred_fallthru
      _
    // Predicated region
    $region18: #{tpu_custom_call.1} parent=1 // pred_check
      _
    $region19: #{tpu_custom_call.1} parent=1 // pred_check_branch
      %44 = sbr.rel (0) target = $region21
    $region20: #{tpu_custom_call.1} parent=1 // pred_region
      _
    $region21: #{tpu_custom_call.1} parent=1 // pred_fallthru
      _
    // Predicated region
    $region22: #{tpu_custom_call.1} parent=1 // pred_check
      _
    $region23: #{tpu_custom_call.1} parent=1 // pred_check_branch
      %46 = sbr.rel (0) target = $region25
    $region24: #{tpu_custom_call.1} parent=1 // pred_region
      %s48 = ssub.s32 1024, 1024
      %49 = vsyncadd [#allocation6], %s48
      %s50 = sshll.u32 [#allocation7], 4
      %s51 = int_to_ptr.vmem [resolvable:$true] %s50
      %56 = dma.hbm_to_vmem [thread:$0]  %s5, 1024, %s51, [#allocation6], 64, 64, 4
    $region25: #{tpu_custom_call.1} parent=1 // pred_fallthru
      _
    // Predicated region
    $region26: #{tpu_custom_call.1} parent=1 // pred_check
      _
    $region27: #{tpu_custom_call.1} parent=1 // pred_check_branch
      %58 = sbr.rel (0) target = $region29
    $region28: #{tpu_custom_call.1} parent=1 // pred_region
      _
    $region29: #{tpu_custom_call.1} parent=1 // pred_fallthru
      _
    // Predicated region
    $region30: #{tpu_custom_call.1} parent=1 // pred_check
      _
    $region31: #{tpu_custom_call.1} parent=1 // pred_check_branch
      %60 = sbr.rel (0) target = $region33
    $region32: #{tpu_custom_call.1} parent=1 // pred_region
      %61 = dma.done [#allocation3], 1024
    $region33: #{tpu_custom_call.1} parent=1 // pred_fallthru
      _
    // Predicated region
    $region34: #{tpu_custom_call.1} parent=1 // pred_check
      _
    $region35: #{tpu_custom_call.1} parent=1 // pred_check_branch
      %63 = sbr.rel (0) target = $region37
    $region36: #{tpu_custom_call.1} parent=1 // pred_region
      %64 = dma.done [#allocation6], 1024
    $region37: #{tpu_custom_call.1} parent=1 // pred_fallthru
      _
    // Predicated region
    $region38: #{tpu_custom_call.1} parent=1 // pred_check
      _
    $region39: #{tpu_custom_call.1} parent=1 // pred_check_branch
      %66 = sbr.rel (0) target = $region41
    $region40: #{tpu_custom_call.1} parent=1 // pred_region
      %67 = dma.done [#allocation6], 1024
    $region41: #{tpu_custom_call.1} parent=1 // pred_fallthru
      _
    %v69 = vld [vmem:[#allocation2] sm:$0xf]
    %v70 = vld [vmem:[#allocation2 + $0x4] sm:$0xf]
    %v71 = vld [vmem:[#allocation2 + $0x8] sm:$0xf]
    %v72 = vld [vmem:[#allocation2 + $0xc] sm:$0xf]
    %v73 = vld [vmem:[#allocation2 + $0x10] sm:$0xf]
    %v74 = vld [vmem:[#allocation2 + $0x14] sm:$0xf]
    %v75 = vld [vmem:[#allocation2 + $0x18] sm:$0xf]
    %v76 = vld [vmem:[#allocation2 + $0x1c] sm:$0xf]
    %v77 = vld [vmem:[#allocation2 + $0x20] sm:$0xf]
    %v78 = vld [vmem:[#allocation2 + $0x24] sm:$0xf]
    %v79 = vld [vmem:[#allocation2 + $0x28] sm:$0xf]
    %v80 = vld [vmem:[#allocation2 + $0x2c] sm:$0xf]
    %v81 = vld [vmem:[#allocation2 + $0x30] sm:$0xf]
    %v82 = vld [vmem:[#allocation2 + $0x34] sm:$0xf]
    %v83 = vld [vmem:[#allocation2 + $0x38] sm:$0xf]
    %v84 = vld [vmem:[#allocation2 + $0x3c] sm:$0xf]
    %v85 = vld [vmem:[%s1] sm:$0xff]
    %v86 = vld [vmem:[%s1 + $0x8] sm:$0xff]
    %v87 = vld [vmem:[%s1 + $0x10] sm:$0xff]
    %v88 = vld [vmem:[%s1 + $0x18] sm:$0xff]
    %v89 = vld [vmem:[%s1 + $0x20] sm:$0xff]
    %v90 = vld [vmem:[%s1 + $0x28] sm:$0xff]
    %v91 = vld [vmem:[%s1 + $0x30] sm:$0xff]
    %v92 = vld [vmem:[%s1 + $0x38] sm:$0xff]
    %v93 = vld [vmem:[%s1 + $0x40] sm:$0xff]
    %v94 = vld [vmem:[%s1 + $0x48] sm:$0xff]
    %v95 = vld [vmem:[%s1 + $0x50] sm:$0xff]
    %v96 = vld [vmem:[%s1 + $0x58] sm:$0xff]
    %v97 = vld [vmem:[%s1 + $0x60] sm:$0xff]
    %v98 = vld [vmem:[%s1 + $0x68] sm:$0xff]
    %v99 = vld [vmem:[%s1 + $0x70] sm:$0xff]
    %v100 = vld [vmem:[%s1 + $0x78] sm:$0xff]
    %v101 = vld [vmem:[%s2] sm:$0xff]
    %v102 = vld [vmem:[%s2 + $0x8] sm:$0xff]
    %v103 = vld [vmem:[%s2 + $0x10] sm:$0xff]
    %v104 = vld [vmem:[%s2 + $0x18] sm:$0xff]
    %v105 = vld [vmem:[%s2 + $0x20] sm:$0xff]
    %v106 = vld [vmem:[%s2 + $0x28] sm:$0xff]
    %v107 = vld [vmem:[%s2 + $0x30] sm:$0xff]
    %v108 = vld [vmem:[%s2 + $0x38] sm:$0xff]
    %v109 = vld [vmem:[%s2 + $0x40] sm:$0xff]
    %v110 = vld [vmem:[%s2 + $0x48] sm:$0xff]
    %v111 = vld [vmem:[%s2 + $0x50] sm:$0xff]
    %v112 = vld [vmem:[%s2 + $0x58] sm:$0xff]
    %v113 = vld [vmem:[%s2 + $0x60] sm:$0xff]
    %v114 = vld [vmem:[%s2 + $0x68] sm:$0xff]
    %v115 = vld [vmem:[%s2 + $0x70] sm:$0xff]
    %v116 = vld [vmem:[%s2 + $0x78] sm:$0xff]
    %v117 = vld [vmem:[#allocation5] sm:$0xf]
    %v118 = vld [vmem:[#allocation5 + $0x4] sm:$0xf]
    %v119 = vld [vmem:[#allocation5 + $0x8] sm:$0xf]
    %v120 = vld [vmem:[#allocation5 + $0xc] sm:$0xf]
    %v121 = vld [vmem:[#allocation5 + $0x10] sm:$0xf]
    %v122 = vld [vmem:[#allocation5 + $0x14] sm:$0xf]
    %v123 = vld [vmem:[#allocation5 + $0x18] sm:$0xf]
    %v124 = vld [vmem:[#allocation5 + $0x1c] sm:$0xf]
    %v125 = vld [vmem:[#allocation5 + $0x20] sm:$0xf]
    %v126 = vld [vmem:[#allocation5 + $0x24] sm:$0xf]
    %v127 = vld [vmem:[#allocation5 + $0x28] sm:$0xf]
    %v128 = vld [vmem:[#allocation5 + $0x2c] sm:$0xf]
    %v129 = vld [vmem:[#allocation5 + $0x30] sm:$0xf]
    %v130 = vld [vmem:[#allocation5 + $0x34] sm:$0xf]
    %v131 = vld [vmem:[#allocation5 + $0x38] sm:$0xf]
    %v132 = vld [vmem:[#allocation5 + $0x3c] sm:$0xf]
    %v133 = vld [vmem:[%s4] sm:$0x1]
    %135 = vset.pattern.permute.xlu0 0
    %136 = vperm.xlu0 %135, %v85
    %v137 = vpop.permute.xlu0 %136
    %140 = vset.pattern.permute.xlu0 0
    %141 = vperm.xlu0 %140, %v86
    %v142 = vpop.permute.xlu0 %141
    %145 = vset.pattern.permute.xlu0 0
    %146 = vperm.xlu0 %145, %v87
    %v147 = vpop.permute.xlu0 %146
    %150 = vset.pattern.permute.xlu0 0
    %151 = vperm.xlu0 %150, %v88
    %v152 = vpop.permute.xlu0 %151
    %155 = vset.pattern.permute.xlu0 0
    %156 = vperm.xlu0 %155, %v89
    %v157 = vpop.permute.xlu0 %156
    %160 = vset.pattern.permute.xlu0 0
    %161 = vperm.xlu0 %160, %v90
    %v162 = vpop.permute.xlu0 %161
    %165 = vset.pattern.permute.xlu0 0
    %166 = vperm.xlu0 %165, %v91
    %v167 = vpop.permute.xlu0 %166
    %170 = vset.pattern.permute.xlu0 0
    %171 = vperm.xlu0 %170, %v92
    %v172 = vpop.permute.xlu0 %171
    %175 = vset.pattern.permute.xlu0 0
    %176 = vperm.xlu0 %175, %v93
    %v177 = vpop.permute.xlu0 %176
    %180 = vset.pattern.permute.xlu0 0
    %181 = vperm.xlu0 %180, %v94
    %v182 = vpop.permute.xlu0 %181
    %185 = vset.pattern.permute.xlu0 0
    %186 = vperm.xlu0 %185, %v95
    %v187 = vpop.permute.xlu0 %186
    %190 = vset.pattern.permute.xlu0 0
    %191 = vperm.xlu0 %190, %v96
    %v192 = vpop.permute.xlu0 %191
    %195 = vset.pattern.permute.xlu0 0
    %196 = vperm.xlu0 %195, %v97
    %v197 = vpop.permute.xlu0 %196
    %200 = vset.pattern.permute.xlu0 0
    %201 = vperm.xlu0 %200, %v98
    %v202 = vpop.permute.xlu0 %201
    %205 = vset.pattern.permute.xlu0 0
    %206 = vperm.xlu0 %205, %v99
    %v207 = vpop.permute.xlu0 %206
    %210 = vset.pattern.permute.xlu0 0
    %211 = vperm.xlu0 %210, %v100
    %v212 = vpop.permute.xlu0 %211
    %v214 = vmul.f32 %v137, %v101
    %v215 = vmul.f32 %v142, %v102
    %v216 = vmul.f32 %v147, %v103
    %v217 = vmul.f32 %v152, %v104
    %v218 = vmul.f32 %v157, %v105
    %v219 = vmul.f32 %v162, %v106
    %v220 = vmul.f32 %v167, %v107
    %v221 = vmul.f32 %v172, %v108
    %v222 = vmul.f32 %v177, %v109
    %v223 = vmul.f32 %v182, %v110
    %v224 = vmul.f32 %v187, %v111
    %v225 = vmul.f32 %v192, %v112
    %v226 = vmul.f32 %v197, %v113
    %v227 = vmul.f32 %v202, %v114
    %v228 = vmul.f32 %v207, %v115
    %v229 = vmul.f32 %v212, %v116
    %v230 = vpack.c.bf16 %v215, %v214
    %v231 = vpack.c.bf16 %v217, %v216
    %v232 = vpack.c.bf16 %v219, %v218
    %v233 = vpack.c.bf16 %v221, %v220
    %v234 = vpack.c.bf16 %v223, %v222
    %v235 = vpack.c.bf16 %v225, %v224
    %v236 = vpack.c.bf16 %v227, %v226
    %v237 = vpack.c.bf16 %v229, %v228
    %v254 = vunpack.c.l.b16 %v69
    %v255 = vunpack.c.l.b16 %v70
    %v256 = vunpack.c.l.b16 %v71
    %v257 = vunpack.c.l.b16 %v72
    %v258 = vunpack.c.l.b16 %v73
    %v259 = vunpack.c.l.b16 %v74
    %v260 = vunpack.c.l.b16 %v75
    %v261 = vunpack.c.l.b16 %v76
    %v262 = vunpack.c.l.b16 %v77
    %v263 = vunpack.c.l.b16 %v78
    %v264 = vunpack.c.l.b16 %v79
    %v265 = vunpack.c.l.b16 %v80
    %v266 = vunpack.c.l.b16 %v81
    %v267 = vunpack.c.l.b16 %v82
    %v268 = vunpack.c.l.b16 %v83
    %v269 = vunpack.c.l.b16 %v84
    %v270 = vpack.c.b16 %v255, %v254
    %v271 = vpack.c.b16 %v257, %v256
    %v272 = vpack.c.b16 %v259, %v258
    %v273 = vpack.c.b16 %v261, %v260
    %v274 = vpack.c.b16 %v263, %v262
    %v275 = vpack.c.b16 %v265, %v264
    %v276 = vpack.c.b16 %v267, %v266
    %v277 = vpack.c.b16 %v269, %v268
    %286 = vmatprep.subr.bf16.mxu0 0
    %287 = vmatpush1.bf16.msra.mxu0 %v230
    %288 = vmatprep.subr.bf16.mxu0 0
    %289 = vmatpush1.bf16.msra.mxu0 %v231
    %290 = vmatprep.subr.bf16.mxu0 0
    %291 = vmatpush1.bf16.msra.mxu0 %v232
    %292 = vmatprep.subr.bf16.mxu0 0
    %293 = vmatpush1.bf16.msra.mxu0 %v233
    %294 = vmatprep.subr.bf16.mxu0 0
    %295 = vmatpush1.bf16.msra.mxu0 %v234
    %296 = vmatprep.subr.bf16.mxu0 0
    %297 = vmatpush1.bf16.msra.mxu0 %v235
    %298 = vmatprep.subr.bf16.mxu0 0
    %299 = vmatpush1.bf16.msra.mxu0 %v236
    %300 = vmatprep.subr.bf16.mxu0 0
    %301 = vmatpush1.bf16.msra.mxu0 %v237
    %302 = vmatprep.subr.bf16.mxu0 0
    %303 = vmatpush1.bf16.msra.mxu0 0
    %304 = vmatprep.subr.bf16.mxu0 0
    %305 = vmatpush1.bf16.msra.mxu0 0
    %306 = vmatprep.subr.bf16.mxu0 0
    %307 = vmatpush1.bf16.msra.mxu0 0
    %308 = vmatprep.subr.bf16.mxu0 0
    %309 = vmatpush1.bf16.msra.mxu0 0
    %310 = vmatprep.subr.bf16.mxu0 0
    %311 = vmatpush1.bf16.msra.mxu0 0
    %312 = vmatprep.subr.bf16.mxu0 0
    %313 = vmatpush1.bf16.msra.mxu0 0
    %314 = vmatprep.subr.bf16.mxu0 0
    %315 = vmatpush1.bf16.msra.mxu0 0
    %316 = vmatprep.subr.bf16.mxu0 0
    %317 = vmatpush1.bf16.msra.mxu0 0
    %318 = vmatprep.mubr.bf16.mxu0 0
    %319 = vmatmul.mubr.bf16.gmra.mrb[0].mxu0 %v270
    %v320 = vpop.f32.mrb[0].mxu0
    %v321 = vadd.f32 0.0, %v320
    %v322 = vpop.f32.mrb[0].mxu0
    %v323 = vpop.f32.mrb[0].mxu0
    %v324 = vadd.f32 0.0, %v323
    %v325 = vpop.f32.mrb[0].mxu0
    %326 = vmatprep.mubr.bf16.mxu0 0
    %327 = vmatmul.mubr.bf16.gmra.mrb[0].mxu0 %v271
    %v328 = vpop.f32.mrb[0].mxu0
    %v329 = vadd.f32 0.0, %v328
    %v330 = vpop.f32.mrb[0].mxu0
    %v331 = vpop.f32.mrb[0].mxu0
    %v332 = vadd.f32 0.0, %v331
    %v333 = vpop.f32.mrb[0].mxu0
    %334 = vmatprep.mubr.bf16.mxu0 0
    %335 = vmatmul.mubr.bf16.gmra.mrb[0].mxu0 %v272
    %v336 = vpop.f32.mrb[0].mxu0
    %v337 = vadd.f32 0.0, %v336
    %v338 = vpop.f32.mrb[0].mxu0
    %v339 = vpop.f32.mrb[0].mxu0
    %v340 = vadd.f32 0.0, %v339
    %v341 = vpop.f32.mrb[0].mxu0
    %342 = vmatprep.mubr.bf16.mxu0 0
    %343 = vmatmul.mubr.bf16.gmra.mrb[0].mxu0 %v273
    %v344 = vpop.f32.mrb[0].mxu0
    %v345 = vadd.f32 0.0, %v344
    %v346 = vpop.f32.mrb[0].mxu0
    %v347 = vpop.f32.mrb[0].mxu0
    %v348 = vadd.f32 0.0, %v347
    %v349 = vpop.f32.mrb[0].mxu0
    %350 = vmatprep.mubr.bf16.mxu0 0
    %351 = vmatmul.mubr.bf16.gmra.mrb[0].mxu0 %v274
    %v352 = vpop.f32.mrb[0].mxu0
    %v353 = vadd.f32 0.0, %v352
    %v354 = vpop.f32.mrb[0].mxu0
    %v355 = vpop.f32.mrb[0].mxu0
    %v356 = vadd.f32 0.0, %v355
    %v357 = vpop.f32.mrb[0].mxu0
    %358 = vmatprep.mubr.bf16.mxu0 0
    %359 = vmatmul.mubr.bf16.gmra.mrb[0].mxu0 %v275
    %v360 = vpop.f32.mrb[0].mxu0
    %v361 = vadd.f32 0.0, %v360
    %v362 = vpop.f32.mrb[0].mxu0
    %v363 = vpop.f32.mrb[0].mxu0
    %v364 = vadd.f32 0.0, %v363
    %v365 = vpop.f32.mrb[0].mxu0
    %366 = vmatprep.mubr.bf16.mxu0 0
    %367 = vmatmul.mubr.bf16.gmra.mrb[0].mxu0 %v276
    %v368 = vpop.f32.mrb[0].mxu0
    %v369 = vadd.f32 0.0, %v368
    %v370 = vpop.f32.mrb[0].mxu0
    %v371 = vpop.f32.mrb[0].mxu0
    %v372 = vadd.f32 0.0, %v371
    %v373 = vpop.f32.mrb[0].mxu0
    %374 = vmatprep.mubr.bf16.mxu0 0
    %375 = vmatmul.mubr.bf16.gmra.mrb[0].mxu0 %v277
    %v376 = vpop.f32.mrb[0].mxu0
    %v377 = vadd.f32 0.0, %v376
    %v378 = vpop.f32.mrb[0].mxu0
    %v379 = vpop.f32.mrb[0].mxu0
    %v380 = vadd.f32 0.0, %v379
    %v381 = vpop.f32.mrb[0].mxu0
    %382 = vdwg.mxu0
    %v383 = vmul.f32 %v137, %v321
    %v384 = vmul.f32 %v142, %v324
    %v385 = vmul.f32 %v147, %v329
    %v386 = vmul.f32 %v152, %v332
    %v387 = vmul.f32 %v157, %v337
    %v388 = vmul.f32 %v162, %v340
    %v389 = vmul.f32 %v167, %v345
    %v390 = vmul.f32 %v172, %v348
    %v391 = vmul.f32 %v177, %v353
    %v392 = vmul.f32 %v182, %v356
    %v393 = vmul.f32 %v187, %v361
    %v394 = vmul.f32 %v192, %v364
    %v395 = vmul.f32 %v197, %v369
    %v396 = vmul.f32 %v202, %v372
    %v397 = vmul.f32 %v207, %v377
    %v398 = vmul.f32 %v212, %v380
    %v399 = vpack.c.bf16 %v384, %v383
    %v400 = vpack.c.bf16 %v386, %v385
    %v401 = vpack.c.bf16 %v388, %v387
    %v402 = vpack.c.bf16 %v390, %v389
    %v403 = vpack.c.bf16 %v392, %v391
    %v404 = vpack.c.bf16 %v394, %v393
    %v405 = vpack.c.bf16 %v396, %v395
    %v406 = vpack.c.bf16 %v398, %v397
    %v408 = vlaneseq
    %v409 = vshrl.u32 %v408, 7
    %v410 = vsub.s32 0, %v409
    %v411 = vrot.slane %v133, %v410
    %v429 = vunpack.c.l.b16 %v117
    %v430 = vunpack.c.l.b16 %v118
    %v431 = vunpack.c.l.b16 %v119
    %v432 = vunpack.c.l.b16 %v120
    %v433 = vunpack.c.l.b16 %v121
    %v434 = vunpack.c.l.b16 %v122
    %v435 = vunpack.c.l.b16 %v123
    %v436 = vunpack.c.l.b16 %v124
    %v437 = vunpack.c.l.b16 %v125
    %v438 = vunpack.c.l.b16 %v126
    %v439 = vunpack.c.l.b16 %v127
    %v440 = vunpack.c.l.b16 %v128
    %v441 = vunpack.c.l.b16 %v129
    %v442 = vunpack.c.l.b16 %v130
    %v443 = vunpack.c.l.b16 %v131
    %v444 = vunpack.c.l.b16 %v132
    %v445 = vpack.c.b16 %v430, %v429
    %v446 = vpack.c.b16 %v432, %v431
    %v447 = vpack.c.b16 %v434, %v433
    %v448 = vpack.c.b16 %v436, %v435
    %v449 = vpack.c.b16 %v438, %v437
    %v450 = vpack.c.b16 %v440, %v439
    %v451 = vpack.c.b16 %v442, %v441
    %v452 = vpack.c.b16 %v444, %v443
    %461 = vmatprep.subr.bf16.mxu0 0
    %462 = vmatpush1.bf16.msra.mxu0 %v445
    %463 = vmatprep.subr.bf16.mxu0 0
    %464 = vmatpush1.bf16.msra.mxu0 %v446
    %465 = vmatprep.subr.bf16.mxu0 0
    %466 = vmatpush1.bf16.msra.mxu0 %v447
    %467 = vmatprep.subr.bf16.mxu0 0
    %468 = vmatpush1.bf16.msra.mxu0 %v448
    %469 = vmatprep.subr.bf16.mxu0 0
    %470 = vmatpush1.bf16.msra.mxu0 %v449
    %471 = vmatprep.subr.bf16.mxu0 0
    %472 = vmatpush1.bf16.msra.mxu0 %v450
    %473 = vmatprep.subr.bf16.mxu0 0
    %474 = vmatpush1.bf16.msra.mxu0 %v451
    %475 = vmatprep.subr.bf16.mxu0 0
    %476 = vmatpush1.bf16.msra.mxu0 %v452
    %477 = vmatprep.subr.bf16.mxu0 0
    %478 = vmatpush1.bf16.msra.mxu0 0
    %479 = vmatprep.subr.bf16.mxu0 0
    %480 = vmatpush1.bf16.msra.mxu0 0
    %481 = vmatprep.subr.bf16.mxu0 0
    %482 = vmatpush1.bf16.msra.mxu0 0
    %483 = vmatprep.subr.bf16.mxu0 0
    %484 = vmatpush1.bf16.msra.mxu0 0
    %485 = vmatprep.subr.bf16.mxu0 0
    %486 = vmatpush1.bf16.msra.mxu0 0
    %487 = vmatprep.subr.bf16.mxu0 0
    %488 = vmatpush1.bf16.msra.mxu0 0
    %489 = vmatprep.subr.bf16.mxu0 0
    %490 = vmatpush1.bf16.msra.mxu0 0
    %491 = vmatprep.subr.bf16.mxu0 0
    %492 = vmatpush1.bf16.msra.mxu0 0
    %493 = vmatprep.mubr.bf16.mxu0 0
    %494 = vmatmul.mubr.bf16.gmra.mrb[0].mxu0 %v399
    %v495 = vpop.f32.mrb[0].mxu0
    %v496 = vadd.f32 %v411, %v495
    %v497 = vpop.f32.mrb[0].mxu0
    %v498 = vpop.f32.mrb[0].mxu0
    %v499 = vadd.f32 %v411, %v498
    %v500 = vpop.f32.mrb[0].mxu0
    %501 = vmatprep.mubr.bf16.mxu0 0
    %502 = vmatmul.mubr.bf16.gmra.mrb[0].mxu0 %v400
    %v503 = vpop.f32.mrb[0].mxu0
    %v504 = vadd.f32 %v411, %v503
    %v505 = vpop.f32.mrb[0].mxu0
    %v506 = vpop.f32.mrb[0].mxu0
    %v507 = vadd.f32 %v411, %v506
    %v508 = vpop.f32.mrb[0].mxu0
    %509 = vmatprep.mubr.bf16.mxu0 0
    %510 = vmatmul.mubr.bf16.gmra.mrb[0].mxu0 %v401
    %v511 = vpop.f32.mrb[0].mxu0
    %v512 = vadd.f32 %v411, %v511
    %v513 = vpop.f32.mrb[0].mxu0
    %v514 = vpop.f32.mrb[0].mxu0
    %v515 = vadd.f32 %v411, %v514
    %v516 = vpop.f32.mrb[0].mxu0
    %517 = vmatprep.mubr.bf16.mxu0 0
    %518 = vmatmul.mubr.bf16.gmra.mrb[0].mxu0 %v402
    %v519 = vpop.f32.mrb[0].mxu0
    %v520 = vadd.f32 %v411, %v519
    %v521 = vpop.f32.mrb[0].mxu0
    %v522 = vpop.f32.mrb[0].mxu0
    %v523 = vadd.f32 %v411, %v522
    %v524 = vpop.f32.mrb[0].mxu0
    %525 = vmatprep.mubr.bf16.mxu0 0
    %526 = vmatmul.mubr.bf16.gmra.mrb[0].mxu0 %v403
    %v527 = vpop.f32.mrb[0].mxu0
    %v528 = vadd.f32 %v411, %v527
    %v529 = vpop.f32.mrb[0].mxu0
    %v530 = vpop.f32.mrb[0].mxu0
    %v531 = vadd.f32 %v411, %v530
    %v532 = vpop.f32.mrb[0].mxu0
    %533 = vmatprep.mubr.bf16.mxu0 0
    %534 = vmatmul.mubr.bf16.gmra.mrb[0].mxu0 %v404
    %v535 = vpop.f32.mrb[0].mxu0
    %v536 = vadd.f32 %v411, %v535
    %v537 = vpop.f32.mrb[0].mxu0
    %v538 = vpop.f32.mrb[0].mxu0
    %v539 = vadd.f32 %v411, %v538
    %v540 = vpop.f32.mrb[0].mxu0
    %541 = vmatprep.mubr.bf16.mxu0 0
    %542 = vmatmul.mubr.bf16.gmra.mrb[0].mxu0 %v405
    %v543 = vpop.f32.mrb[0].mxu0
    %v544 = vadd.f32 %v411, %v543
    %v545 = vpop.f32.mrb[0].mxu0
    %v546 = vpop.f32.mrb[0].mxu0
    %v547 = vadd.f32 %v411, %v546
    %v548 = vpop.f32.mrb[0].mxu0
    %549 = vmatprep.mubr.bf16.mxu0 0
    %550 = vmatmul.mubr.bf16.gmra.mrb[0].mxu0 %v406
    %v551 = vpop.f32.mrb[0].mxu0
    %v552 = vadd.f32 %v411, %v551
    %v553 = vpop.f32.mrb[0].mxu0
    %v554 = vpop.f32.mrb[0].mxu0
    %v555 = vadd.f32 %v411, %v554
    %v556 = vpop.f32.mrb[0].mxu0
    %557 = vdwg.mxu0
    %v558 = vmax.f32 %v496, 0.0
    %v559 = vmax.f32 %v499, 0.0
    %v560 = vmax.f32 %v504, 0.0
    %v561 = vmax.f32 %v507, 0.0
    %v562 = vmax.f32 %v512, 0.0
    %v563 = vmax.f32 %v515, 0.0
    %v564 = vmax.f32 %v520, 0.0
    %v565 = vmax.f32 %v523, 0.0
    %v566 = vmax.f32 %v528, 0.0
    %v567 = vmax.f32 %v531, 0.0
    %v568 = vmax.f32 %v536, 0.0
    %v569 = vmax.f32 %v539, 0.0
    %v570 = vmax.f32 %v544, 0.0
    %v571 = vmax.f32 %v547, 0.0
    %v572 = vmax.f32 %v552, 0.0
    %v573 = vmax.f32 %v555, 0.0
    %v574 = vld [vmem:[#allocation7] sm:$0xf]
    %v575 = vld [vmem:[#allocation7 + $0x4] sm:$0xf]
    %v576 = vld [vmem:[#allocation7 + $0x8] sm:$0xf]
    %v577 = vld [vmem:[#allocation7 + $0xc] sm:$0xf]
    %v578 = vld [vmem:[#allocation7 + $0x10] sm:$0xf]
    %v579 = vld [vmem:[#allocation7 + $0x14] sm:$0xf]
    %v580 = vld [vmem:[#allocation7 + $0x18] sm:$0xf]
    %v581 = vld [vmem:[#allocation7 + $0x1c] sm:$0xf]
    %v582 = vld [vmem:[#allocation7 + $0x20] sm:$0xf]
    %v583 = vld [vmem:[#allocation7 + $0x24] sm:$0xf]
    %v584 = vld [vmem:[#allocation7 + $0x28] sm:$0xf]
    %v585 = vld [vmem:[#allocation7 + $0x2c] sm:$0xf]
    %v586 = vld [vmem:[#allocation7 + $0x30] sm:$0xf]
    %v587 = vld [vmem:[#allocation7 + $0x34] sm:$0xf]
    %v588 = vld [vmem:[#allocation7 + $0x38] sm:$0xf]
    %v589 = vld [vmem:[#allocation7 + $0x3c] sm:$0xf]
    %v590 = vld [vmem:[%s6] sm:$0x1]
    %v591 = vmul.f32 %v137, %v558
    %v592 = vmul.f32 %v142, %v559
    %v593 = vmul.f32 %v147, %v560
    %v594 = vmul.f32 %v152, %v561
    %v595 = vmul.f32 %v157, %v562
    %v596 = vmul.f32 %v162, %v563
    %v597 = vmul.f32 %v167, %v564
    %v598 = vmul.f32 %v172, %v565
    %v599 = vmul.f32 %v177, %v566
    %v600 = vmul.f32 %v182, %v567
    %v601 = vmul.f32 %v187, %v568
    %v602 = vmul.f32 %v192, %v569
    %v603 = vmul.f32 %v197, %v570
    %v604 = vmul.f32 %v202, %v571
    %v605 = vmul.f32 %v207, %v572
    %v606 = vmul.f32 %v212, %v573
    %v607 = vpack.c.bf16 %v592, %v591
    %v608 = vpack.c.bf16 %v594, %v593
    %v609 = vpack.c.bf16 %v596, %v595
    %v610 = vpack.c.bf16 %v598, %v597
    %v611 = vpack.c.bf16 %v600, %v599
    %v612 = vpack.c.bf16 %v602, %v601
    %v613 = vpack.c.bf16 %v604, %v603
    %v614 = vpack.c.bf16 %v606, %v605
    %615 = vmatprep.subr.bf16.mxu0 0
    %616 = vmatpush1.bf16.msra.mxu0 %v607
    %617 = vmatprep.subr.bf16.mxu0 0
    %618 = vmatpush1.bf16.msra.mxu0 %v608
    %619 = vmatprep.subr.bf16.mxu0 0
    %620 = vmatpush1.bf16.msra.mxu0 %v609
    %621 = vmatprep.subr.bf16.mxu0 0
    %622 = vmatpush1.bf16.msra.mxu0 %v610
    %623 = vmatprep.subr.bf16.mxu0 0
    %624 = vmatpush1.bf16.msra.mxu0 %v611
    %625 = vmatprep.subr.bf16.mxu0 0
    %626 = vmatpush1.bf16.msra.mxu0 %v612
    %627 = vmatprep.subr.bf16.mxu0 0
    %628 = vmatpush1.bf16.msra.mxu0 %v613
    %629 = vmatprep.subr.bf16.mxu0 0
    %630 = vmatpush1.bf16.msra.mxu0 %v614
    %631 = vmatprep.subr.bf16.mxu0 0
    %632 = vmatpush1.bf16.msra.mxu0 0
    %633 = vmatprep.subr.bf16.mxu0 0
    %634 = vmatpush1.bf16.msra.mxu0 0
    %635 = vmatprep.subr.bf16.mxu0 0
    %636 = vmatpush1.bf16.msra.mxu0 0
    %637 = vmatprep.subr.bf16.mxu0 0
    %638 = vmatpush1.bf16.msra.mxu0 0
    %639 = vmatprep.subr.bf16.mxu0 0
    %640 = vmatpush1.bf16.msra.mxu0 0
    %641 = vmatprep.subr.bf16.mxu0 0
    %642 = vmatpush1.bf16.msra.mxu0 0
    %643 = vmatprep.subr.bf16.mxu0 0
    %644 = vmatpush1.bf16.msra.mxu0 0
    %645 = vmatprep.subr.bf16.mxu0 0
    %646 = vmatpush1.bf16.msra.mxu0 0
    %647 = vmatprep.mubr.bf16.mxu0 0
    %648 = vmatmul.mubr.bf16.gmra.mrb[0].mxu0 %v270
    %v649 = vpop.f32.mrb[0].mxu0
    %v650 = vadd.f32 0.0, %v649
    %v651 = vpop.f32.mrb[0].mxu0
    %v652 = vpop.f32.mrb[0].mxu0
    %v653 = vadd.f32 0.0, %v652
    %v654 = vpop.f32.mrb[0].mxu0
    %655 = vmatprep.mubr.bf16.mxu0 0
    %656 = vmatmul.mubr.bf16.gmra.mrb[0].mxu0 %v271
    %v657 = vpop.f32.mrb[0].mxu0
    %v658 = vadd.f32 0.0, %v657
    %v659 = vpop.f32.mrb[0].mxu0
    %v660 = vpop.f32.mrb[0].mxu0
    %v661 = vadd.f32 0.0, %v660
    %v662 = vpop.f32.mrb[0].mxu0
    %663 = vmatprep.mubr.bf16.mxu0 0
    %664 = vmatmul.mubr.bf16.gmra.mrb[0].mxu0 %v272
    %v665 = vpop.f32.mrb[0].mxu0
    %v666 = vadd.f32 0.0, %v665
    %v667 = vpop.f32.mrb[0].mxu0
    %v668 = vpop.f32.mrb[0].mxu0
    %v669 = vadd.f32 0.0, %v668
    %v670 = vpop.f32.mrb[0].mxu0
    %671 = vmatprep.mubr.bf16.mxu0 0
    %672 = vmatmul.mubr.bf16.gmra.mrb[0].mxu0 %v273
    %v673 = vpop.f32.mrb[0].mxu0
    %v674 = vadd.f32 0.0, %v673
    %v675 = vpop.f32.mrb[0].mxu0
    %v676 = vpop.f32.mrb[0].mxu0
    %v677 = vadd.f32 0.0, %v676
    %v678 = vpop.f32.mrb[0].mxu0
    %679 = vmatprep.mubr.bf16.mxu0 0
    %680 = vmatmul.mubr.bf16.gmra.mrb[0].mxu0 %v274
    %v681 = vpop.f32.mrb[0].mxu0
    %v682 = vadd.f32 0.0, %v681
    %v683 = vpop.f32.mrb[0].mxu0
    %v684 = vpop.f32.mrb[0].mxu0
    %v685 = vadd.f32 0.0, %v684
    %v686 = vpop.f32.mrb[0].mxu0
    %687 = vmatprep.mubr.bf16.mxu0 0
    %688 = vmatmul.mubr.bf16.gmra.mrb[0].mxu0 %v275
    %v689 = vpop.f32.mrb[0].mxu0
    %v690 = vadd.f32 0.0, %v689
    %v691 = vpop.f32.mrb[0].mxu0
    %v692 = vpop.f32.mrb[0].mxu0
    %v693 = vadd.f32 0.0, %v692
    %v694 = vpop.f32.mrb[0].mxu0
    %695 = vmatprep.mubr.bf16.mxu0 0
    %696 = vmatmul.mubr.bf16.gmra.mrb[0].mxu0 %v276
    %v697 = vpop.f32.mrb[0].mxu0
    %v698 = vadd.f32 0.0, %v697
    %v699 = vpop.f32.mrb[0].mxu0
    %v700 = vpop.f32.mrb[0].mxu0
    %v701 = vadd.f32 0.0, %v700
    %v702 = vpop.f32.mrb[0].mxu0
    %703 = vmatprep.mubr.bf16.mxu0 0
    %704 = vmatmul.mubr.bf16.gmra.mrb[0].mxu0 %v277
    %v705 = vpop.f32.mrb[0].mxu0
    %v706 = vadd.f32 0.0, %v705
    %v707 = vpop.f32.mrb[0].mxu0
    %v708 = vpop.f32.mrb[0].mxu0
    %v709 = vadd.f32 0.0, %v708
    %v710 = vpop.f32.mrb[0].mxu0
    %711 = vdwg.mxu0
    %v712 = vmul.f32 %v137, %v650
    %v713 = vmul.f32 %v142, %v653
    %v714 = vmul.f32 %v147, %v658
    %v715 = vmul.f32 %v152, %v661
    %v716 = vmul.f32 %v157, %v666
    %v717 = vmul.f32 %v162, %v669
    %v718 = vmul.f32 %v167, %v674
    %v719 = vmul.f32 %v172, %v677
    %v720 = vmul.f32 %v177, %v682
    %v721 = vmul.f32 %v182, %v685
    %v722 = vmul.f32 %v187, %v690
    %v723 = vmul.f32 %v192, %v693
    %v724 = vmul.f32 %v197, %v698
    %v725 = vmul.f32 %v202, %v701
    %v726 = vmul.f32 %v207, %v706
    %v727 = vmul.f32 %v212, %v709
    %v728 = vpack.c.bf16 %v713, %v712
    %v729 = vpack.c.bf16 %v715, %v714
    %v730 = vpack.c.bf16 %v717, %v716
    %v731 = vpack.c.bf16 %v719, %v718
    %v732 = vpack.c.bf16 %v721, %v720
    %v733 = vpack.c.bf16 %v723, %v722
    %v734 = vpack.c.bf16 %v725, %v724
    %v735 = vpack.c.bf16 %v727, %v726
    %v737 = vlaneseq
    %v738 = vshrl.u32 %v737, 7
    %v739 = vsub.s32 0, %v738
    %v740 = vrot.slane %v590, %v739
    %v758 = vunpack.c.l.b16 %v574
    %v759 = vunpack.c.l.b16 %v575
    %v760 = vunpack.c.l.b16 %v576
    %v761 = vunpack.c.l.b16 %v577
    %v762 = vunpack.c.l.b16 %v578
    %v763 = vunpack.c.l.b16 %v579
    %v764 = vunpack.c.l.b16 %v580
    %v765 = vunpack.c.l.b16 %v581
    %v766 = vunpack.c.l.b16 %v582
    %v767 = vunpack.c.l.b16 %v583
    %v768 = vunpack.c.l.b16 %v584
    %v769 = vunpack.c.l.b16 %v585
    %v770 = vunpack.c.l.b16 %v586
    %v771 = vunpack.c.l.b16 %v587
    %v772 = vunpack.c.l.b16 %v588
    %v773 = vunpack.c.l.b16 %v589
    %v774 = vpack.c.b16 %v759, %v758
    %v775 = vpack.c.b16 %v761, %v760
    %v776 = vpack.c.b16 %v763, %v762
    %v777 = vpack.c.b16 %v765, %v764
    %v778 = vpack.c.b16 %v767, %v766
    %v779 = vpack.c.b16 %v769, %v768
    %v780 = vpack.c.b16 %v771, %v770
    %v781 = vpack.c.b16 %v773, %v772
    %790 = vmatprep.subr.bf16.mxu0 0
    %791 = vmatpush1.bf16.msra.mxu0 %v774
    %792 = vmatprep.subr.bf16.mxu0 0
    %793 = vmatpush1.bf16.msra.mxu0 %v775
    %794 = vmatprep.subr.bf16.mxu0 0
    %795 = vmatpush1.bf16.msra.mxu0 %v776
    %796 = vmatprep.subr.bf16.mxu0 0
    %797 = vmatpush1.bf16.msra.mxu0 %v777
    %798 = vmatprep.subr.bf16.mxu0 0
    %799 = vmatpush1.bf16.msra.mxu0 %v778
    %800 = vmatprep.subr.bf16.mxu0 0
    %801 = vmatpush1.bf16.msra.mxu0 %v779
    %802 = vmatprep.subr.bf16.mxu0 0
    %803 = vmatpush1.bf16.msra.mxu0 %v780
    %804 = vmatprep.subr.bf16.mxu0 0
    %805 = vmatpush1.bf16.msra.mxu0 %v781
    %806 = vmatprep.subr.bf16.mxu0 0
    %807 = vmatpush1.bf16.msra.mxu0 0
    %808 = vmatprep.subr.bf16.mxu0 0
    %809 = vmatpush1.bf16.msra.mxu0 0
    %810 = vmatprep.subr.bf16.mxu0 0
    %811 = vmatpush1.bf16.msra.mxu0 0
    %812 = vmatprep.subr.bf16.mxu0 0
    %813 = vmatpush1.bf16.msra.mxu0 0
    %814 = vmatprep.subr.bf16.mxu0 0
    %815 = vmatpush1.bf16.msra.mxu0 0
    %816 = vmatprep.subr.bf16.mxu0 0
    %817 = vmatpush1.bf16.msra.mxu0 0
    %818 = vmatprep.subr.bf16.mxu0 0
    %819 = vmatpush1.bf16.msra.mxu0 0
    %820 = vmatprep.subr.bf16.mxu0 0
    %821 = vmatpush1.bf16.msra.mxu0 0
    %822 = vmatprep.mubr.bf16.mxu0 0
    %823 = vmatmul.mubr.bf16.gmra.mrb[0].mxu0 %v728
    %v824 = vpop.f32.mrb[0].mxu0
    %v825 = vadd.f32 %v740, %v824
    %v826 = vpop.f32.mrb[0].mxu0
    %v827 = vpop.f32.mrb[0].mxu0
    %v828 = vadd.f32 %v740, %v827
    %v829 = vpop.f32.mrb[0].mxu0
    %830 = vmatprep.mubr.bf16.mxu0 0
    %831 = vmatmul.mubr.bf16.gmra.mrb[0].mxu0 %v729
    %v832 = vpop.f32.mrb[0].mxu0
    %v833 = vadd.f32 %v740, %v832
    %v834 = vpop.f32.mrb[0].mxu0
    %v835 = vpop.f32.mrb[0].mxu0
    %v836 = vadd.f32 %v740, %v835
    %v837 = vpop.f32.mrb[0].mxu0
    %838 = vmatprep.mubr.bf16.mxu0 0
    %839 = vmatmul.mubr.bf16.gmra.mrb[0].mxu0 %v730
    %v840 = vpop.f32.mrb[0].mxu0
    %v841 = vadd.f32 %v740, %v840
    %v842 = vpop.f32.mrb[0].mxu0
    %v843 = vpop.f32.mrb[0].mxu0
    %v844 = vadd.f32 %v740, %v843
    %v845 = vpop.f32.mrb[0].mxu0
    %846 = vmatprep.mubr.bf16.mxu0 0
    %847 = vmatmul.mubr.bf16.gmra.mrb[0].mxu0 %v731
    %v848 = vpop.f32.mrb[0].mxu0
    %v849 = vadd.f32 %v740, %v848
    %v850 = vpop.f32.mrb[0].mxu0
    %v851 = vpop.f32.mrb[0].mxu0
    %v852 = vadd.f32 %v740, %v851
    %v853 = vpop.f32.mrb[0].mxu0
    %854 = vmatprep.mubr.bf16.mxu0 0
    %855 = vmatmul.mubr.bf16.gmra.mrb[0].mxu0 %v732
    %v856 = vpop.f32.mrb[0].mxu0
    %v857 = vadd.f32 %v740, %v856
    %v858 = vpop.f32.mrb[0].mxu0
    %v859 = vpop.f32.mrb[0].mxu0
    %v860 = vadd.f32 %v740, %v859
    %v861 = vpop.f32.mrb[0].mxu0
    %862 = vmatprep.mubr.bf16.mxu0 0
    %863 = vmatmul.mubr.bf16.gmra.mrb[0].mxu0 %v733
    %v864 = vpop.f32.mrb[0].mxu0
    %v865 = vadd.f32 %v740, %v864
    %v866 = vpop.f32.mrb[0].mxu0
    %v867 = vpop.f32.mrb[0].mxu0
    %v868 = vadd.f32 %v740, %v867
    %v869 = vpop.f32.mrb[0].mxu0
    %870 = vmatprep.mubr.bf16.mxu0 0
    %871 = vmatmul.mubr.bf16.gmra.mrb[0].mxu0 %v734
    %v872 = vpop.f32.mrb[0].mxu0
    %v873 = vadd.f32 %v740, %v872
    %v874 = vpop.f32.mrb[0].mxu0
    %v875 = vpop.f32.mrb[0].mxu0
    %v876 = vadd.f32 %v740, %v875
    %v877 = vpop.f32.mrb[0].mxu0
    %878 = vmatprep.mubr.bf16.mxu0 0
    %879 = vmatmul.mubr.bf16.gmra.mrb[0].mxu0 %v735
    %v880 = vpop.f32.mrb[0].mxu0
    %v881 = vadd.f32 %v740, %v880
    %v882 = vpop.f32.mrb[0].mxu0
    %v883 = vpop.f32.mrb[0].mxu0
    %v884 = vadd.f32 %v740, %v883
    %v885 = vpop.f32.mrb[0].mxu0
    %886 = vdwg.mxu0
    %v887 = vmax.f32 %v825, 0.0
    %v888 = vmax.f32 %v828, 0.0
    %v889 = vmax.f32 %v833, 0.0
    %v890 = vmax.f32 %v836, 0.0
    %v891 = vmax.f32 %v841, 0.0
    %v892 = vmax.f32 %v844, 0.0
    %v893 = vmax.f32 %v849, 0.0
    %v894 = vmax.f32 %v852, 0.0
    %v895 = vmax.f32 %v857, 0.0
    %v896 = vmax.f32 %v860, 0.0
    %v897 = vmax.f32 %v865, 0.0
    %v898 = vmax.f32 %v868, 0.0
    %v899 = vmax.f32 %v873, 0.0
    %v900 = vmax.f32 %v876, 0.0
    %v901 = vmax.f32 %v881, 0.0
    %v902 = vmax.f32 %v884, 0.0
    %903 = vst [vmem:[#allocation8] sm:$0xff] %v887
    %904 = vst [vmem:[#allocation8 + $0x8] sm:$0xff] %v888
    %905 = vst [vmem:[#allocation8 + $0x10] sm:$0xff] %v889
    %906 = vst [vmem:[#allocation8 + $0x18] sm:$0xff] %v890
    %907 = vst [vmem:[#allocation8 + $0x20] sm:$0xff] %v891
    %908 = vst [vmem:[#allocation8 + $0x28] sm:$0xff] %v892
    %909 = vst [vmem:[#allocation8 + $0x30] sm:$0xff] %v893
    %910 = vst [vmem:[#allocation8 + $0x38] sm:$0xff] %v894
    %911 = vst [vmem:[#allocation8 + $0x40] sm:$0xff] %v895
    %912 = vst [vmem:[#allocation8 + $0x48] sm:$0xff] %v896
    %913 = vst [vmem:[#allocation8 + $0x50] sm:$0xff] %v897
    %914 = vst [vmem:[#allocation8 + $0x58] sm:$0xff] %v898
    %915 = vst [vmem:[#allocation8 + $0x60] sm:$0xff] %v899
    %916 = vst [vmem:[#allocation8 + $0x68] sm:$0xff] %v900
    %917 = vst [vmem:[#allocation8 + $0x70] sm:$0xff] %v901
    %918 = vst [vmem:[#allocation8 + $0x78] sm:$0xff] %v902
    // Predicated region
    $region42: #{tpu_custom_call.1} parent=1 // pred_check
      _
    $region43: #{tpu_custom_call.1} parent=1 // pred_check_branch
      %920 = sbr.rel (0) target = $region45
    $region44: #{tpu_custom_call.1} parent=1 // pred_region
      %s922 = ssub.s32 2048, 2048
      %923 = vsyncadd [#allocation4], %s922
      %s924 = sshll.u32 [#allocation8], 4
      %s925 = int_to_ptr.vmem [resolvable:$true] %s924
      %930 = dma.vmem_to_hbm [thread:$0]  %s925, 2048, %s7, [#allocation4], 128, 128, 8
    $region45: #{tpu_custom_call.1} parent=1 // pred_fallthru
      _
    // Predicated region
    $region46: #{tpu_custom_call.1} parent=1 // pred_check
      _
    $region47: #{tpu_custom_call.1} parent=1 // pred_check_branch
      %932 = sbr.rel (0) target = $region49
    $region48: #{tpu_custom_call.1} parent=1 // pred_region
      %933 = dma.done [#allocation4], 2048
    $region49: #{tpu_custom_call.1} parent=1 // pred_fallthru
      _
    %934 = vsyncpa [#allocation3], 1
    %935 = vsyncpa [#allocation6], 1
    %936 = vsyncpa [#allocation4], 1

</llo_original>
